<compile_context>
chip_gen: v6e
topology: v6e:2x2x1
jax: 0.10.0
libtpu: 0.0.40
codegen_flags: <defaults>
</compile_context>

<pallas_src>
import jax
import jax.numpy as jnp
from jax import lax
from jax.experimental import pallas as pl
from jax.experimental.pallas import tpu as pltpu


def _round_up(x: int, m: int) -> int:
    return ((x + m - 1) // m) * m


def _linear_kernel_single_k(x_ref, w_ref, b_ref, o_ref):
    # x_ref: (tm, K)  w_ref: (tn, K)  b_ref: (1, tn)  o_ref: (tm, tn)
    acc = lax.dot_general(
        x_ref[...],
        w_ref[...],
        dimension_numbers=(((1,), (1,)), ((), ())),
        preferred_element_type=jnp.float32,
    )
    o_ref[...] = (acc + b_ref[...].astype(jnp.float32)).astype(o_ref.dtype)


def _linear_kernel_multi_k(x_ref, w_ref, b_ref, o_ref, acc_ref):
    # x_ref : (tm, tk)  input tile
    # w_ref : (tn, tk)  weight tile, PyTorch layout [out_features, in_features]
    # b_ref : (1, tn)   bias tile
    # o_ref : (tm, tn)  output tile
    # acc_ref: (tm, tn) f32 accumulator scratch (resident across the K axis)
    k = pl.program_id(2)

    @pl.when(k == 0)
    def _():
        acc_ref[...] = jnp.zeros_like(acc_ref)

    # x[m,k] * w[n,k] -> [m,n]; contraction on dim 1 of both operands keeps the
    # weight in its native [N, K] layout (no HBM-level transpose in the glue).
    acc_ref[...] += lax.dot_general(
        x_ref[...],
        w_ref[...],
        dimension_numbers=(((1,), (1,)), ((), ())),
        preferred_element_type=jnp.float32,
    )

    @pl.when(k == pl.num_programs(2) - 1)
    def _():
        o_ref[...] = (acc_ref[...] + b_ref[...].astype(jnp.float32)).astype(o_ref.dtype)


def toplayer_forward(x, weight, bias, *, tm=256, tn=512, tk=1024):
    """y = x @ weight.T + bias   (matches nn.Linear(feature_demention, numclass)).

    x:      (M, K)
    weight: (N, K)   -- PyTorch nn.Linear layout, NOT transposed here
    bias:   (N,)
    """
    M, K = x.shape
    N, K2 = weight.shape
    assert K == K2, "weight in_features must match x feature dim"
    out_dtype = x.dtype
    itemsize = jnp.dtype(out_dtype).itemsize

    # Clamp tiles to the (padded) problem size, respecting TPU tiling rules:
    #   tm multiple of 8 (sublanes), tn / tk multiples of 128 (lanes).
    # Defaults (256, 512, 1024) double-buffered use ~8 MiB of VMEM in f32,
    # which fits the default scoped VMEM limit on v5e/v6e/v7x with headroom.
    tm = min(tm, _round_up(M, 8))
    tn = min(tn, _round_up(N, 128))
    tk = min(tk, _round_up(K, 128))

    M_p = _round_up(M, tm)
    N_p = _round_up(N, tn)
    K_p = _round_up(K, tk)

    # Zero-pad to tile multiples: padded K columns contribute 0 to the dot,
    # padded rows / classes are sliced off below.
    x_p = x if (M_p, K_p) == (M, K) else jnp.pad(x, ((0, M_p - M), (0, K_p - K)))
    w_p = weight if (N_p, K_p) == (N, K) else jnp.pad(weight, ((0, N_p - N), (0, K_p - K)))
    b_p = bias if N_p == N else jnp.pad(bias, (0, N_p - N))
    b_p = b_p.reshape(1, N_p)

    cost = pl.CostEstimate(
        flops=2 * M * N * K,
        transcendentals=0,
        bytes_accessed=(M * K + N * K + M * N + N) * itemsize,
    )

    single_k = K_p == tk

    if single_k:
        # Whole reduction dim fits one tile: 2-D grid, no accumulator scratch,
        # no pl.when phase gating.
        grid = (N_p // tn, M_p // tm)
        out = pl.pallas_call(
            _linear_kernel_single_k,
            out_shape=jax.ShapeDtypeStruct((M_p, N_p), out_dtype),
            grid_spec=pltpu.PrefetchScalarGridSpec(
                num_scalar_prefetch=0,
                grid=grid,
                in_specs=[
                    pl.BlockSpec((tm, K_p), lambda j, i: (i, 0)),   # x tile
                    pl.BlockSpec((tn, K_p), lambda j, i: (j, 0)),   # weight tile [N, K]
                    pl.BlockSpec((1, tn), lambda j, i: (0, j)),     # bias tile
                ],
                out_specs=pl.BlockSpec((tm, tn), lambda j, i: (i, j)),
            ),
            compiler_params=pltpu.CompilerParams(
                dimension_semantics=("parallel", "parallel"),
            ),
            cost_estimate=cost,
        )(x_p, w_p, b_p)
    else:
        # General path: K tiled, f32 accumulator resident across the K axis.
        grid = (N_p // tn, M_p // tm, K_p // tk)
        out = pl.pallas_call(
            _linear_kernel_multi_k,
            out_shape=jax.ShapeDtypeStruct((M_p, N_p), out_dtype),
            grid_spec=pltpu.PrefetchScalarGridSpec(
                num_scalar_prefetch=0,
                grid=grid,
                in_specs=[
                    pl.BlockSpec((tm, tk), lambda j, i, k: (i, k)),  # x tile
                    pl.BlockSpec((tn, tk), lambda j, i, k: (j, k)),  # weight tile [N, K]
                    pl.BlockSpec((1, tn), lambda j, i, k: (0, j)),   # bias tile
                ],
                out_specs=pl.BlockSpec((tm, tn), lambda j, i, k: (i, j)),
                scratch_shapes=[pltpu.VMEM((tm, tn), jnp.float32)],
            ),
            compiler_params=pltpu.CompilerParams(
                # M/N axes are independent -> can shard across the 2 TCs on v7x;
                # K is the reduction axis carried in the accumulator scratch.
                dimension_semantics=("parallel", "parallel", "arbitrary"),
            ),
            cost_estimate=cost,
        )(x_p, w_p, b_p)

    return out[:M, :N]


# TODO(synk): Incremental_learning (re-allocating fc and copying old weights) is
# host-side parameter surgery, not a device kernel; it is intentionally not
# translated to Pallas.


if __name__ == "__main__":
    key = jax.random.PRNGKey(0)

    # Small, module-consistent shapes: batch=8, feature_demention=32, numclass=16.
    batch, feature_dim, numclass = 8, 32, 16
    kx, kw, kb = jax.random.split(key, 3)
    x = jax.random.normal(kx, (batch, feature_dim), dtype=jnp.float32)
    weight = jax.random.normal(kw, (numclass, feature_dim), dtype=jnp.float32) * 0.1
    bias = jax.random.normal(kb, (numclass,), dtype=jnp.float32) * 0.1

    y = toplayer_forward(x, weight, bias)
    jax.block_until_ready(y)
    y_ref = x @ weight.T + bias
    assert y.shape == y_ref.shape
    assert jnp.allclose(y, y_ref, atol=1e-5, rtol=1e-5), "mismatch vs reference (aligned)"

    # Second check: non-aligned shapes exercise the padding / multi-tile path.
    batch2, feat2, nc2 = 37, 50, 19
    kx2, kw2, kb2 = jax.random.split(jax.random.PRNGKey(1), 3)
    x2 = jax.random.normal(kx2, (batch2, feat2), dtype=jnp.float32)
    w2 = jax.random.normal(kw2, (nc2, feat2), dtype=jnp.float32) * 0.1
    b2 = jax.random.normal(kb2, (nc2,), dtype=jnp.float32) * 0.1

    y2 = toplayer_forward(x2, w2, b2)
    jax.block_until_ready(y2)
    y2_ref = x2 @ w2.T + b2
    assert jnp.allclose(y2, y2_ref, atol=1e-5, rtol=1e-5), "mismatch vs reference (padded)"

    # Third check: force small tiles so the K-reduction (accumulator) path runs.
    batch3, feat3, nc3 = 12, 300, 40
    kx3, kw3, kb3 = jax.random.split(jax.random.PRNGKey(2), 3)
    x3 = jax.random.normal(kx3, (batch3, feat3), dtype=jnp.float32)
    w3 = jax.random.normal(kw3, (nc3, feat3), dtype=jnp.float32) * 0.1
    b3 = jax.random.normal(kb3, (nc3,), dtype=jnp.float32) * 0.1

    y3 = toplayer_forward(x3, w3, b3, tm=8, tn=128, tk=128)
    jax.block_until_ready(y3)
    y3_ref = x3 @ w3.T + b3
    assert jnp.allclose(y3, y3_ref, atol=1e-4, rtol=1e-5), "mismatch vs reference (K-tiled)"

    print("KERNEL_OK")
</pallas_src>

<mosaic_0001>
module attributes {stable_mosaic.version = 11 : i64} {
  func.func @_linear_kernel_single_k(%arg0: i32, %arg1: i32, %arg2: memref<8x128xf32, #tpu.memory_space<vmem>>, %arg3: memref<128x128xf32, #tpu.memory_space<vmem>>, %arg4: memref<1x128xf32, #tpu.memory_space<vmem>>, %arg5: memref<8x128xf32, #tpu.memory_space<vmem>>) attributes {dimension_semantics = [#tpu.dimension_semantics<parallel>, #tpu.dimension_semantics<parallel>], iteration_bounds = array<i64: 1, 1>, scalar_prefetch = 0 : i64, scratch_operands = 0 : i64, tpu.core_type = #tpu.core_type<tc>, window_params = [{transform_indices = @transform_0, window_bounds = array<i64: 8, 128>}, {transform_indices = @transform_1, window_bounds = array<i64: 128, 128>}, {transform_indices = @transform_2, window_bounds = array<i64: 1, 128>}, {transform_indices = @transform_3, window_bounds = array<i64: 8, 128>}]} {
    %c0 = arith.constant 0 : index
    %c0_0 = arith.constant 0 : index
    %0 = vector.load %arg2[%c0, %c0_0] : memref<8x128xf32, #tpu.memory_space<vmem>>, vector<8x128xf32>
    %c0_1 = arith.constant 0 : index
    %c0_2 = arith.constant 0 : index
    %1 = vector.load %arg3[%c0_1, %c0_2] : memref<128x128xf32, #tpu.memory_space<vmem>>, vector<128x128xf32>
    %cst = arith.constant dense<0.000000e+00> : vector<8x128xf32>
    %2 = tpu.matmul %0, %1, %cst {dimension_numbers = #tpu.dot_dimension_numbers<[1], [1], [0], [0], [0, 0, 1, 0], [], []>} : vector<8x128xf32>, vector<128x128xf32>, vector<8x128xf32> -> vector<8x128xf32>
    %c0_3 = arith.constant 0 : index
    %c0_4 = arith.constant 0 : index
    %3 = vector.load %arg4[%c0_3, %c0_4] : memref<1x128xf32, #tpu.memory_space<vmem>>, vector<1x128xf32>
    %4 = vector.broadcast %3 : vector<1x128xf32> to vector<8x128xf32>
    %5 = arith.addf %2, %4 : vector<8x128xf32>
    %c0_5 = arith.constant 0 : index
    %c0_6 = arith.constant 0 : index
    %6 = vector.load %arg5[%c0_5, %c0_6] : memref<8x128xf32, #tpu.memory_space<vmem>>, vector<8x128xf32>
    tpu.vector_store %arg5[%c0_5, %c0_6], %5 {strides = array<i32>} : memref<8x128xf32, #tpu.memory_space<vmem>>, vector<8x128xf32>,
    return
  }
  func.func @transform_0(%arg0: i32, %arg1: i32) -> (i32, i32) {
    %c0_i32 = arith.constant 0 : i32
    %c0_i32_0 = arith.constant 0 : i32
    return %arg1, %c0_i32 : i32, i32
  }
  func.func @transform_1(%arg0: i32, %arg1: i32) -> (i32, i32) {
    %c0_i32 = arith.constant 0 : i32
    %c0_i32_0 = arith.constant 0 : i32
    return %arg0, %c0_i32 : i32, i32
  }
  func.func @transform_2(%arg0: i32, %arg1: i32) -> (i32, i32) {
    %c0_i32 = arith.constant 0 : i32
    %c0_i32_0 = arith.constant 0 : i32
    return %c0_i32, %arg0 : i32, i32
  }
  func.func @transform_3(%arg0: i32, %arg1: i32) -> (i32, i32) {
    %c0_i32 = arith.constant 0 : i32
    return %arg1, %arg0 : i32, i32
  }
}

</mosaic_0001>

<llo_original>
// kernel: tpu_custom_call.1
$region0: #{tpu_custom_call.1}
  #allocation0 [shape = 'u32[]', space=smem, size = 0x4, offset = 0x4, fixed_abs, tag = 'smem constant byte address 0x4 - core index']
  #allocation1 [shape = 'u32[144,128]{1,0:T(1,128)}', space=vmem, size = 0x12000, scoped, tag = 'internal scratch']
  %s0 = inlined_call_operand.hbm [shape: f32[8,128], index: 0, kind: input, shape index: {}]
  %s1 = inlined_call_operand.hbm [shape: f32[128,128], index: 1, kind: input, shape index: {}]
  %s2 = inlined_call_operand.vmem [shape: f32[1,128], index: 2, kind: input, shape index: {}]
  %s3 = inlined_call_operand.hbm [shape: f32[8,128], index: 3, kind: output, shape index: {}]
  %s4 = sld [smem:[#allocation0]]
  $region30: #{tpu_custom_call.1} parent=0
    _
  %s6 = ssub.s32 1, %s4
  %s7 = scalar_select 0, %s6, %s4
  $region1: #{tpu_custom_call.1} parent=0
    #allocation2 [shape = 'u8[4096]{0}', space=vmem, size = 0x1000, scoped, tag = 'input window, operand 0, single buffered']
    #allocation3 [shape = 's32[1]{0}', space=sflag, size = 0x4, scoped, tag = 'scoped memory for tpu_custom_call.1']
    #allocation4 [shape = 's32[1]{0}', space=sflag, size = 0x4, scoped, tag = 'scoped memory for tpu_custom_call.1']
    #allocation5 [shape = 'u8[65536]{0}', space=vmem, size = 0x10000, scoped, tag = 'input window, operand 1, single buffered']
    #allocation6 [shape = 's32[1]{0}', space=sflag, size = 0x4, scoped, tag = 'scoped memory for tpu_custom_call.1']
    #allocation7 [shape = 'u8[4096]{0}', space=vmem, size = 0x1000, scoped, tag = 'output window, operand 0, single buffered']
    %8 = vsyncpa [#allocation3], 0
    %9 = vsyncpa [#allocation6], 0
    %10 = vsyncpa [#allocation4], 0
    // Predicated region
    $region2: #{tpu_custom_call.1} parent=1 // pred_check
      _
    $region3: #{tpu_custom_call.1} parent=1 // pred_check_branch
      %12 = sbr.rel (0) target = $region5
    $region4: #{tpu_custom_call.1} parent=1 // pred_region
      %s14 = ssub.s32 128, 128
      %15 = vsyncadd [#allocation3], %s14
      %s17 = sshll.u32 [#allocation2], 4
      %s18 = int_to_ptr.vmem [resolvable:$true] %s17
      %20 = dma.hbm_to_vmem [thread:$0]  %s0, 128, %s18, [#allocation3]
    $region5: #{tpu_custom_call.1} parent=1 // pred_fallthru
      _
    // Predicated region
    $region6: #{tpu_custom_call.1} parent=1 // pred_check
      _
    $region7: #{tpu_custom_call.1} parent=1 // pred_check_branch
      %22 = sbr.rel (0) target = $region9
    $region8: #{tpu_custom_call.1} parent=1 // pred_region
      %s24 = ssub.s32 2048, 2048
      %25 = vsyncadd [#allocation6], %s24
      %s26 = sshll.u32 [#allocation5], 4
      %s27 = int_to_ptr.vmem [resolvable:$true] %s26
      %32 = dma.hbm_to_vmem [thread:$0]  %s1, 2048, %s27, [#allocation6], 128, 128, 8
    $region9: #{tpu_custom_call.1} parent=1 // pred_fallthru
      _
    // Predicated region
    $region10: #{tpu_custom_call.1} parent=1 // pred_check
      _
    $region11: #{tpu_custom_call.1} parent=1 // pred_check_branch
      %34 = sbr.rel (0) target = $region13
    $region12: #{tpu_custom_call.1} parent=1 // pred_region
      _
    $region13: #{tpu_custom_call.1} parent=1 // pred_fallthru
      _
    // Predicated region
    $region14: #{tpu_custom_call.1} parent=1 // pred_check
      _
    $region15: #{tpu_custom_call.1} parent=1 // pred_check_branch
      %36 = sbr.rel (0) target = $region17
    $region16: #{tpu_custom_call.1} parent=1 // pred_region
      %37 = dma.done [#allocation3], 128
    $region17: #{tpu_custom_call.1} parent=1 // pred_fallthru
      _
    // Predicated region
    $region18: #{tpu_custom_call.1} parent=1 // pred_check
      _
    $region19: #{tpu_custom_call.1} parent=1 // pred_check_branch
      %39 = sbr.rel (0) target = $region21
    $region20: #{tpu_custom_call.1} parent=1 // pred_region
      %40 = dma.done [#allocation6], 2048
    $region21: #{tpu_custom_call.1} parent=1 // pred_fallthru
      _
    %v41 = vld [vmem:[#allocation2] sm:$0xff]
    %v42 = vld [vmem:[#allocation5] sm:$0xff]
    %v43 = vld [vmem:[#allocation5 + $0x8] sm:$0xff]
    %v44 = vld [vmem:[#allocation5 + $0x10] sm:$0xff]
    %v45 = vld [vmem:[#allocation5 + $0x18] sm:$0xff]
    %v46 = vld [vmem:[#allocation5 + $0x20] sm:$0xff]
    %v47 = vld [vmem:[#allocation5 + $0x28] sm:$0xff]
    %v48 = vld [vmem:[#allocation5 + $0x30] sm:$0xff]
    %v49 = vld [vmem:[#allocation5 + $0x38] sm:$0xff]
    %v50 = vld [vmem:[#allocation5 + $0x40] sm:$0xff]
    %v51 = vld [vmem:[#allocation5 + $0x48] sm:$0xff]
    %v52 = vld [vmem:[#allocation5 + $0x50] sm:$0xff]
    %v53 = vld [vmem:[#allocation5 + $0x58] sm:$0xff]
    %v54 = vld [vmem:[#allocation5 + $0x60] sm:$0xff]
    %v55 = vld [vmem:[#allocation5 + $0x68] sm:$0xff]
    %v56 = vld [vmem:[#allocation5 + $0x70] sm:$0xff]
    %v57 = vld [vmem:[#allocation5 + $0x78] sm:$0xff]
    %v58 = vld [vmem:[%s2] sm:$0x1]
    %v60 = vlaneseq
    %v61 = vshrl.u32 %v60, 7
    %v62 = vsub.s32 0, %v61
    %v63 = vrot.slane %v58, %v62
    %65 = vmatprep.subr.mxu0 0.0
    %66 = vmatpush1.xpose.msra.mxu0 %v57
    %67 = vmatprep.subr.mxu0 0.0
    %68 = vmatpush1.xpose.msra.mxu0 %v56
    %69 = vmatprep.subr.mxu0 0.0
    %70 = vmatpush1.xpose.msra.mxu0 %v55
    %71 = vmatprep.subr.mxu0 0.0
    %72 = vmatpush1.xpose.msra.mxu0 %v54
    %73 = vmatprep.subr.mxu0 0.0
    %74 = vmatpush1.xpose.msra.mxu0 %v53
    %75 = vmatprep.subr.mxu0 0.0
    %76 = vmatpush1.xpose.msra.mxu0 %v52
    %77 = vmatprep.subr.mxu0 0.0
    %78 = vmatpush1.xpose.msra.mxu0 %v51
    %79 = vmatprep.subr.mxu0 0.0
    %80 = vmatpush1.xpose.msra.mxu0 %v50
    %81 = vmatprep.subr.mxu0 0.0
    %82 = vmatpush1.xpose.msra.mxu0 %v49
    %83 = vmatprep.subr.mxu0 0.0
    %84 = vmatpush1.xpose.msra.mxu0 %v48
    %85 = vmatprep.subr.mxu0 0.0
    %86 = vmatpush1.xpose.msra.mxu0 %v47
    %87 = vmatprep.subr.mxu0 0.0
    %88 = vmatpush1.xpose.msra.mxu0 %v46
    %89 = vmatprep.subr.mxu0 0.0
    %90 = vmatpush1.xpose.msra.mxu0 %v45
    %91 = vmatprep.subr.mxu0 0.0
    %92 = vmatpush1.xpose.msra.mxu0 %v44
    %93 = vmatprep.subr.mxu0 0.0
    %94 = vmatpush1.xpose.msra.mxu0 %v43
    %95 = vmatprep.subr.mxu0 0.0
    %96 = vmatpush1.xpose.msra.mxu0 %v42
    %97 = vmatprep.subr.mxu0 0.0
    %98 = vmatpush2.xpose.msra.mxu0 0.0
    %99 = vmatprep.subr.mxu0 0.0
    %100 = vmatpush2.xpose.msra.mxu0 0.0
    %101 = vmatprep.subr.mxu0 0.0
    %102 = vmatpush2.xpose.msra.mxu0 0.0
    %103 = vmatprep.subr.mxu0 0.0
    %104 = vmatpush2.xpose.msra.mxu0 0.0
    %105 = vmatprep.subr.mxu0 0.0
    %106 = vmatpush2.xpose.msra.mxu0 0.0
    %107 = vmatprep.subr.mxu0 0.0
    %108 = vmatpush2.xpose.msra.mxu0 0.0
    %109 = vmatprep.subr.mxu0 0.0
    %110 = vmatpush2.xpose.msra.mxu0 0.0
    %111 = vmatprep.subr.mxu0 0.0
    %112 = vmatpush2.xpose.msra.mxu0 0.0
    %113 = vmatprep.subr.mxu0 0.0
    %114 = vmatpush2.xpose.msra.mxu0 0.0
    %115 = vmatprep.subr.mxu0 0.0
    %116 = vmatpush2.xpose.msra.mxu0 0.0
    %117 = vmatprep.subr.mxu0 0.0
    %118 = vmatpush2.xpose.msra.mxu0 0.0
    %119 = vmatprep.subr.mxu0 0.0
    %120 = vmatpush2.xpose.msra.mxu0 0.0
    %121 = vmatprep.subr.mxu0 0.0
    %122 = vmatpush2.xpose.msra.mxu0 0.0
    %123 = vmatprep.subr.mxu0 0.0
    %124 = vmatpush2.xpose.msra.mxu0 0.0
    %125 = vmatprep.subr.mxu0 0.0
    %126 = vmatpush2.xpose.msra.mxu0 0.0
    %127 = vmatprep.subr.mxu0 0.0
    %128 = vmatpush2.xpose.msra.mxu0 0.0
    %129 = vmatprep.mubr.f32.mxu0 0.0
    %130 = vmatmul.mubr.f32.gmra.mxu0 %v41
    %v131 = vpop.f32.mrf.mxu0
    %v132 = vadd.f32 %v63, %v131
    %v133 = vpop.f32.mrf.mxu0
    %134 = vdwg.mxu0
    %135 = vst [vmem:[#allocation7] sm:$0xff] %v132
    // Predicated region
    $region22: #{tpu_custom_call.1} parent=1 // pred_check
      _
    $region23: #{tpu_custom_call.1} parent=1 // pred_check_branch
      %137 = sbr.rel (0) target = $region25
    $region24: #{tpu_custom_call.1} parent=1 // pred_region
      %s139 = ssub.s32 128, 128
      %140 = vsyncadd [#allocation4], %s139
      %s142 = sshll.u32 [#allocation7], 4
      %s143 = int_to_ptr.vmem [resolvable:$true] %s142
      %145 = dma.vmem_to_hbm [thread:$0]  %s143, 128, %s3, [#allocation4]
    $region25: #{tpu_custom_call.1} parent=1 // pred_fallthru
      _
    // Predicated region
    $region26: #{tpu_custom_call.1} parent=1 // pred_check
      _
    $region27: #{tpu_custom_call.1} parent=1 // pred_check_branch
      %147 = sbr.rel (0) target = $region29
    $region28: #{tpu_custom_call.1} parent=1 // pred_region
      %148 = dma.done [#allocation4], 128
    $region29: #{tpu_custom_call.1} parent=1 // pred_fallthru
      _
    %149 = vsyncpa [#allocation3], 1
    %150 = vsyncpa [#allocation6], 1
    %151 = vsyncpa [#allocation4], 1

</llo_original>
